<compile_context>
chip_gen: v5e
topology: v5e:2x2
jax: 0.10.0
libtpu: 0.0.40
codegen_flags: <defaults>
</compile_context>

<pallas_src>
import jax
import jax.numpy as jnp
from jax.experimental import pallas as pl
from jax.experimental.pallas import tpu as pltpu

EPS = 1e-5
LANE = 128
SUBLANE = 8
VMEM_LIMIT = 32 << 20           # safe scoped-VMEM limit on v5e / v6e / v7x
VMEM_BUDGET = 16 << 20          # tile-sizing budget (headroom under the limit)


def _round_up(a, b):
    return ((a + b - 1) // b) * b


def _pick_tm(m, c_in, c4p, budget_bytes=VMEM_BUDGET, tm_max=2048):
    """Largest row tile (multiple of 8) whose double-buffered footprint fits budget."""
    w_bytes = c_in * c4p * 4
    per_row = 2 * 4 * (c_in + 2 * c4p)      # 2 bufs x f32 x (x block + out/y block)
    tm = max(SUBLANE, (budget_bytes - w_bytes) // per_row)
    tm = min(tm, tm_max)
    tm = max(SUBLANE, (tm // SUBLANE) * SUBLANE)
    tm = min(tm, _round_up(m, SUBLANE))
    return tm


# ---------------------------------------------------------------------------
# Pass 1: matmul + per-column partial sum / sum-of-squares (BN batch stats)
# ---------------------------------------------------------------------------
def _deconv_stats_kernel(x_ref, w_ref, psum_ref, psq_ref):
    y = jnp.dot(x_ref[...], w_ref[...], preferred_element_type=jnp.float32)  # (tm, C4p)
    tm, c4 = y.shape
    # Reduce the tm rows down to 8 sublanes (VPU adds across aligned (8,128) slabs);
    # the final 8 -> 1 collapse happens on the host over the tiny partials.
    y3 = y.reshape(tm // SUBLANE, SUBLANE, c4)
    psum_ref[...] = jnp.sum(y3, axis=0)
    psq_ref[...] = jnp.sum(y3 * y3, axis=0)


def deconv_stats(x2, w2, *, tm):
    mp, c_in = x2.shape
    _, c4p = w2.shape
    nblk = mp // tm
    return pl.pallas_call(
        _deconv_stats_kernel,
        out_shape=(
            jax.ShapeDtypeStruct((nblk, SUBLANE, c4p), jnp.float32),
            jax.ShapeDtypeStruct((nblk, SUBLANE, c4p), jnp.float32),
        ),
        grid_spec=pltpu.PrefetchScalarGridSpec(
            num_scalar_prefetch=0,
            grid=(nblk,),
            in_specs=[
                pl.BlockSpec((tm, c_in), lambda i: (i, 0)),
                pl.BlockSpec((c_in, c4p), lambda i: (0, 0)),
            ],
            out_specs=(
                pl.BlockSpec((None, SUBLANE, c4p), lambda i: (i, 0, 0)),
                pl.BlockSpec((None, SUBLANE, c4p), lambda i: (i, 0, 0)),
            ),
        ),
        compiler_params=pltpu.CompilerParams(
            dimension_semantics=("parallel",),
            vmem_limit_bytes=VMEM_LIMIT,
        ),
    )(x2, w2)


# ---------------------------------------------------------------------------
# Pass 2: recompute matmul, fused BN affine + ReLU, lane-dense output
# ---------------------------------------------------------------------------
def _deconv_bn_relu_kernel(x_ref, w_ref, scale_ref, shift_ref, o_ref):
    y = jnp.dot(x_ref[...], w_ref[...], preferred_element_type=jnp.float32)
    o_ref[...] = jnp.maximum(y * scale_ref[...] + shift_ref[...], 0.0)


def deconv_bn_relu(x2, w2, scale, shift, *, tm):
    mp, c_in = x2.shape
    _, c4p = w2.shape
    nblk = mp // tm
    return pl.pallas_call(
        _deconv_bn_relu_kernel,
        out_shape=jax.ShapeDtypeStruct((mp, c4p), jnp.float32),
        grid_spec=pltpu.PrefetchScalarGridSpec(
            num_scalar_prefetch=0,
            grid=(nblk,),
            in_specs=[
                pl.BlockSpec((tm, c_in), lambda i: (i, 0)),
                pl.BlockSpec((c_in, c4p), lambda i: (0, 0)),
                pl.BlockSpec((1, c4p), lambda i: (0, 0)),
                pl.BlockSpec((1, c4p), lambda i: (0, 0)),
            ],
            out_specs=pl.BlockSpec((tm, c4p), lambda i: (i, 0)),
        ),
        compiler_params=pltpu.CompilerParams(
            dimension_semantics=("parallel",),
            vmem_limit_bytes=VMEM_LIMIT,
        ),
    )(x2, w2, scale, shift)


# ---------------------------------------------------------------------------
# Full DeConvolution forward (ConvTranspose2d(k=2,s=2) -> BN(train) -> ReLU)
# ---------------------------------------------------------------------------
def deconvolution_forward(x, weight, bias, gamma, beta):
    # x:      (N, C_in, H, W)        NCHW, matching PyTorch
    # weight: (C_in, C_out, 2, 2)    PyTorch ConvTranspose2d layout
    # bias:   (C_out,)               dropped: cancelled exactly by train-mode BN mean
    # gamma, beta: (C_out,)          BatchNorm2d affine params
    del bias
    n, c_in, h, w = x.shape
    c_out = weight.shape[1]
    c4 = 4 * c_out
    c4p = _round_up(c4, LANE)       # lane-dense output columns (multiple of 128)
    m = n * h * w

    # --- layout glue: channel-last flatten, pad to tile-friendly shapes ---
    x2 = jnp.transpose(x, (0, 2, 3, 1)).reshape(m, c_in)                    # (M, C_in)
    w2 = jnp.transpose(weight, (0, 2, 3, 1)).reshape(c_in, c4)              # (C_in, 4*C_out)
    w2p = jnp.pad(w2, ((0, 0), (0, c4p - c4)))                              # zero cols

    tm = _pick_tm(m, c_in, c4p)
    mp = _round_up(m, tm)
    x2p = jnp.pad(x2, ((0, mp - m), (0, 0)))                                # zero rows

    # --- pass 1: matmul + per-column partial batch statistics ---
    psum, psq = deconv_stats(x2p, w2p, tm=tm)
    col_sum = jnp.sum(psum, axis=(0, 1))[:c4]                               # (4*C_out,)
    col_sq = jnp.sum(psq, axis=(0, 1))[:c4]
    count = jnp.float32(m * 4)                                              # true element count
    ch_sum = col_sum.reshape(4, c_out).sum(axis=0)                          # per output channel
    ch_sq = col_sq.reshape(4, c_out).sum(axis=0)
    mean = ch_sum / count
    var = ch_sq / count - mean * mean                                       # biased, like BN train
    rstd = jax.lax.rsqrt(var + EPS)
    scale_c = gamma * rstd
    shift_c = beta - mean * scale_c
    scale = jnp.pad(jnp.tile(scale_c, 4), (0, c4p - c4)).reshape(1, c4p)
    shift = jnp.pad(jnp.tile(shift_c, 4), (0, c4p - c4)).reshape(1, c4p)

    # --- pass 2: recompute the cheap matmul, fused BN affine + ReLU ---
    out_p = deconv_bn_relu(x2p, w2p, scale, shift, tm=tm)                   # (Mp, C4p)

    # --- layout glue: drop padding, scatter 2x2 kernel positions back to NCHW ---
    out = out_p[:m, :c4].reshape(n, h, w, 2, 2, c_out)
    out = jnp.transpose(out, (0, 5, 1, 3, 2, 4)).reshape(n, c_out, 2 * h, 2 * w)
    return out


# ---------------------------------------------------------------------------
# Pure-JAX reference for verification
# ---------------------------------------------------------------------------
def deconvolution_reference(x, weight, bias, gamma, beta):
    y = jnp.einsum("ncij,cokl->noikjl", x, weight)                          # (N,C_out,H,2,W,2)
    n, c_out = y.shape[0], y.shape[1]
    y = y.reshape(n, c_out, 2 * x.shape[2], 2 * x.shape[3]) + bias[None, :, None, None]
    mean = jnp.mean(y, axis=(0, 2, 3), keepdims=True)
    var = jnp.mean((y - mean) ** 2, axis=(0, 2, 3), keepdims=True)
    y = (y - mean) * jax.lax.rsqrt(var + EPS)
    y = y * gamma[None, :, None, None] + beta[None, :, None, None]
    return jnp.maximum(y, 0.0)


if __name__ == "__main__":
    hidden_dim = 32
    N, H, W = 2, 8, 8
    C_in, C_out = hidden_dim, hidden_dim // 2

    key = jax.random.PRNGKey(0)
    kx, kw, kb = jax.random.split(key, 3)
    x = jax.random.normal(kx, (N, C_in, H, W), dtype=jnp.float32)
    weight = jax.random.normal(kw, (C_in, C_out, 2, 2), dtype=jnp.float32) * 0.1
    bias = jax.random.normal(kb, (C_out,), dtype=jnp.float32) * 0.05
    gamma = jnp.ones((C_out,), dtype=jnp.float32)    # PyTorch BatchNorm2d default init
    beta = jnp.zeros((C_out,), dtype=jnp.float32)

    out = jax.jit(deconvolution_forward)(x, weight, bias, gamma, beta)
    out = jax.block_until_ready(out)

    ref = deconvolution_reference(x, weight, bias, gamma, beta)
    assert out.shape == (N, C_out, 2 * H, 2 * W), out.shape
    assert jnp.allclose(out, ref, rtol=1e-4, atol=1e-4), float(jnp.max(jnp.abs(out - ref)))

    print("KERNEL_OK")
</pallas_src>

<mosaic_0001>
module attributes {stable_mosaic.version = 11 : i64} {
  func.func @_deconv_stats_kernel(%arg0: i32, %arg1: memref<128x32xf32, #tpu.memory_space<vmem>>, %arg2: memref<32x128xf32, #tpu.memory_space<vmem>>, %arg3: memref<1x8x128xf32, #tpu.memory_space<vmem>>, %arg4: memref<1x8x128xf32, #tpu.memory_space<vmem>>) attributes {dimension_semantics = [#tpu.dimension_semantics<parallel>], iteration_bounds = array<i64: 1>, scalar_prefetch = 0 : i64, scratch_operands = 0 : i64, tpu.core_type = #tpu.core_type<tc>, window_params = [{transform_indices = @transform_0, window_bounds = array<i64: 128, 32>}, {pipeline_mode = #tpu.pipeline_mode<synchronous>, transform_indices = @transform_1, window_bounds = array<i64: 32, 128>}, {transform_indices = @transform_2, window_bounds = array<i64: 1, 8, 128>}, {transform_indices = @transform_3, window_bounds = array<i64: 1, 8, 128>}]} {
    %c0 = arith.constant 0 : index
    %c0_0 = arith.constant 0 : index
    %0 = vector.load %arg1[%c0, %c0_0] : memref<128x32xf32, #tpu.memory_space<vmem>>, vector<128x32xf32>
    %c0_1 = arith.constant 0 : index
    %c0_2 = arith.constant 0 : index
    %1 = vector.load %arg2[%c0_1, %c0_2] : memref<32x128xf32, #tpu.memory_space<vmem>>, vector<32x128xf32>
    %cst = arith.constant dense<0.000000e+00> : vector<128x128xf32>
    %2 = tpu.matmul %0, %1, %cst {dimension_numbers = #tpu.dot_dimension_numbers<[1], [0], [0], [1], [0, 0, 1, 1], [], []>} : vector<128x32xf32>, vector<32x128xf32>, vector<128x128xf32> -> vector<128x128xf32>
    %3 = vector.shape_cast %2 : vector<128x128xf32> to vector<16x8x128xf32>
    %cst_3 = arith.constant dense<0.000000e+00> : vector<8x128xf32>
    %4 = vector.multi_reduction <add>, %3, %cst_3 [0] : vector<16x8x128xf32> to vector<8x128xf32>
    %c0_4 = arith.constant 0 : index
    %c0_5 = arith.constant 0 : index
    %c0_6 = arith.constant 0 : index
    %5 = vector.load %arg3[%c0_4, %c0_5, %c0_6] : memref<1x8x128xf32, #tpu.memory_space<vmem>>, vector<1x8x128xf32>
    %6 = vector.shape_cast %5 : vector<1x8x128xf32> to vector<8x128xf32>
    %7 = vector.shape_cast %4 : vector<8x128xf32> to vector<1x8x128xf32>
    tpu.vector_store %arg3[%c0_4, %c0_5, %c0_6], %7 {strides = array<i32>} : memref<1x8x128xf32, #tpu.memory_space<vmem>>, vector<1x8x128xf32>,
    %8 = arith.mulf %3, %3 : vector<16x8x128xf32>
    %cst_7 = arith.constant dense<0.000000e+00> : vector<8x128xf32>
    %9 = vector.multi_reduction <add>, %8, %cst_7 [0] : vector<16x8x128xf32> to vector<8x128xf32>
    %c0_8 = arith.constant 0 : index
    %c0_9 = arith.constant 0 : index
    %c0_10 = arith.constant 0 : index
    %10 = vector.load %arg4[%c0_8, %c0_9, %c0_10] : memref<1x8x128xf32, #tpu.memory_space<vmem>>, vector<1x8x128xf32>
    %11 = vector.shape_cast %10 : vector<1x8x128xf32> to vector<8x128xf32>
    %12 = vector.shape_cast %9 : vector<8x128xf32> to vector<1x8x128xf32>
    tpu.vector_store %arg4[%c0_8, %c0_9, %c0_10], %12 {strides = array<i32>} : memref<1x8x128xf32, #tpu.memory_space<vmem>>, vector<1x8x128xf32>,
    return
  }
  func.func @transform_0(%arg0: i32) -> (i32, i32) {
    %c0_i32 = arith.constant 0 : i32
    %c0_i32_0 = arith.constant 0 : i32
    return %arg0, %c0_i32 : i32, i32
  }
  func.func @transform_1(%arg0: i32) -> (i32, i32) {
    %c0_i32 = arith.constant 0 : i32
    %c0_i32_0 = arith.constant 0 : i32
    %c0_i32_1 = arith.constant 0 : i32
    return %c0_i32, %c0_i32_0 : i32, i32
  }
  func.func @transform_2(%arg0: i32) -> (i32, i32, i32) {
    %c0_i32 = arith.constant 0 : i32
    %c0_i32_0 = arith.constant 0 : i32
    %c0_i32_1 = arith.constant 0 : i32
    return %arg0, %c0_i32, %c0_i32_0 : i32, i32, i32
  }
  func.func @transform_3(%arg0: i32) -> (i32, i32, i32) {
    %c0_i32 = arith.constant 0 : i32
    %c0_i32_0 = arith.constant 0 : i32
    %c0_i32_1 = arith.constant 0 : i32
    return %arg0, %c0_i32, %c0_i32_0 : i32, i32, i32
  }
}

module attributes {stable_mosaic.version = 11 : i64} {
  func.func @_deconv_bn_relu_kernel(%arg0: i32, %arg1: memref<128x32xf32, #tpu.memory_space<vmem>>, %arg2: memref<32x128xf32, #tpu.memory_space<vmem>>, %arg3: memref<1x128xf32, #tpu.memory_space<vmem>>, %arg4: memref<1x128xf32, #tpu.memory_space<vmem>>, %arg5: memref<128x128xf32, #tpu.memory_space<vmem>>) attributes {dimension_semantics = [#tpu.dimension_semantics<parallel>], iteration_bounds = array<i64: 1>, scalar_prefetch = 0 : i64, scratch_operands = 0 : i64, tpu.core_type = #tpu.core_type<tc>, window_params = [{transform_indices = @transform_0, window_bounds = array<i64: 128, 32>}, {pipeline_mode = #tpu.pipeline_mode<synchronous>, transform_indices = @transform_1, window_bounds = array<i64: 32, 128>}, {pipeline_mode = #tpu.pipeline_mode<synchronous>, transform_indices = @transform_2, window_bounds = array<i64: 1, 128>}, {pipeline_mode = #tpu.pipeline_mode<synchronous>, transform_indices = @transform_3, window_bounds = array<i64: 1, 128>}, {transform_indices = @transform_4, window_bounds = array<i64: 128, 128>}]} {
    %c0 = arith.constant 0 : index
    %c0_0 = arith.constant 0 : index
    %0 = vector.load %arg1[%c0, %c0_0] : memref<128x32xf32, #tpu.memory_space<vmem>>, vector<128x32xf32>
    %c0_1 = arith.constant 0 : index
    %c0_2 = arith.constant 0 : index
    %1 = vector.load %arg2[%c0_1, %c0_2] : memref<32x128xf32, #tpu.memory_space<vmem>>, vector<32x128xf32>
    %cst = arith.constant dense<0.000000e+00> : vector<128x128xf32>
    %2 = tpu.matmul %0, %1, %cst {dimension_numbers = #tpu.dot_dimension_numbers<[1], [0], [0], [1], [0, 0, 1, 1], [], []>} : vector<128x32xf32>, vector<32x128xf32>, vector<128x128xf32> -> vector<128x128xf32>
    %c0_3 = arith.constant 0 : index
    %c0_4 = arith.constant 0 : index
    %3 = vector.load %arg3[%c0_3, %c0_4] : memref<1x128xf32, #tpu.memory_space<vmem>>, vector<1x128xf32>
    %4 = vector.broadcast %3 : vector<1x128xf32> to vector<128x128xf32>
    %5 = arith.mulf %2, %4 : vector<128x128xf32>
    %c0_5 = arith.constant 0 : index
    %c0_6 = arith.constant 0 : index
    %6 = vector.load %arg4[%c0_5, %c0_6] : memref<1x128xf32, #tpu.memory_space<vmem>>, vector<1x128xf32>
    %7 = vector.broadcast %6 : vector<1x128xf32> to vector<128x128xf32>
    %8 = arith.addf %5, %7 : vector<128x128xf32>
    %cst_7 = arith.constant 0.000000e+00 : f32
    %9 = vector.broadcast %cst_7 : f32 to vector<128x128xf32>
    %10 = arith.maximumf %8, %9 : vector<128x128xf32>
    %c0_8 = arith.constant 0 : index
    %c0_9 = arith.constant 0 : index
    %11 = vector.load %arg5[%c0_8, %c0_9] : memref<128x128xf32, #tpu.memory_space<vmem>>, vector<128x128xf32>
    tpu.vector_store %arg5[%c0_8, %c0_9], %10 {strides = array<i32>} : memref<128x128xf32, #tpu.memory_space<vmem>>, vector<128x128xf32>,
    return
  }
  func.func @transform_0(%arg0: i32) -> (i32, i32) {
    %c0_i32 = arith.constant 0 : i32
    %c0_i32_0 = arith.constant 0 : i32
    return %arg0, %c0_i32 : i32, i32
  }
  func.func @transform_1(%arg0: i32) -> (i32, i32) {
    %c0_i32 = arith.constant 0 : i32
    %c0_i32_0 = arith.constant 0 : i32
    %c0_i32_1 = arith.constant 0 : i32
    return %c0_i32, %c0_i32_0 : i32, i32
  }
  func.func @transform_2(%arg0: i32) -> (i32, i32) {
    %c0_i32 = arith.constant 0 : i32
    %c0_i32_0 = arith.constant 0 : i32
    %c0_i32_1 = arith.constant 0 : i32
    return %c0_i32, %c0_i32_0 : i32, i32
  }
  func.func @transform_3(%arg0: i32) -> (i32, i32) {
    %c0_i32 = arith.constant 0 : i32
    %c0_i32_0 = arith.constant 0 : i32
    %c0_i32_1 = arith.constant 0 : i32
    return %c0_i32, %c0_i32_0 : i32, i32
  }
  func.func @transform_4(%arg0: i32) -> (i32, i32) {
    %c0_i32 = arith.constant 0 : i32
    %c0_i32_0 = arith.constant 0 : i32
    return %arg0, %c0_i32 : i32, i32
  }
}

</mosaic_0001>

<llo_original>
// kernel: tile.18
$region0: #{tile.18}
  #allocation0 [shape = 's32[1]{0}', space=sflag, size = 0x4, scoped, tag = 'scoped memory for tile.18']
  %s0 = inlined_call_operand.vmem [shape: f32[16], index: 0, kind: input, shape index: {}]
  %s1 = inlined_call_operand.vmem [shape: f32[4,16], index: 1, kind: output, shape index: {}]
  // Predicated region
  $region2: #{tile.18} parent=0 // pred_check
    _
  $region3: #{tile.18} parent=0 // pred_check_branch
    %3 = sbr.rel (0) target = $region5
  $region4: #{tile.18} parent=0 // pred_region
    _
  $region5: #{tile.18} parent=0 // pred_fallthru
    _
  %v4 = vld [vmem:[%s0] ss:$0 sm:$0xff]
  %5 = vst [vmem:[%s1] sm:$0xf] %v4

// kernel: tile.19
$region0: #{tile.19}
  %s0 = inlined_call_operand.vmem [shape: f32[4,16], index: 0, kind: input, shape index: {}]
  %s1 = inlined_call_operand.vmem [shape: f32[64], index: 1, kind: output, shape index: {}]
  $region1: #{tile.19} parent=0
    #allocation0 [shape = 'u8[4096]{0}', space=vmem, size = 0x1000, scoped, tag = 'scoped mem for output reshape']
    #allocation1 [shape = 'u8[4096]{0}', space=vmem, size = 0x1000, scoped, tag = 'scoped mem for input reshape']
    %s3 = ssub.s32 16, 1
    %v4 = vld [vmem:[%s0] sm:%s3]
    %5 = vst [vmem:[#allocation1] sm:%s3] %v4
    %v6 = vld [vmem:[#allocation1] sm:$0x1]
    %vm7 = vcmask 130048
    %8 = vst.msk [vmem:[#allocation0] sm:$0x1] %vm7, %v6
    %s9 = scalar_lea.vmem [#allocation1], 3
    %v10 = vld [vmem:[%s9] sm:$0x1]
    %11 = vrot.lane.b32.xlu0 %v10, 48
    %v12 = vpop.permute.xlu0 %11
    %vm13 = vcmask 523648
    %14 = vst.msk [vmem:[#allocation0] sm:$0x1] %vm13, %v12
    %s15 = scalar_lea.vmem [#allocation1], 2
    %v16 = vld [vmem:[%s15] sm:$0x1]
    %17 = vrot.lane.b32.xlu0 %v16, 32
    %v18 = vpop.permute.xlu0 %17
    %vm19 = vcmask 392448
    %20 = vst.msk [vmem:[#allocation0] sm:$0x1] %vm19, %v18
    %s21 = scalar_lea.vmem [#allocation1], 1
    %v22 = vld [vmem:[%s21] sm:$0x1]
    %23 = vrot.lane.b32.xlu0 %v22, 16
    %v24 = vpop.permute.xlu0 %23
    %vm25 = vcmask 261248
    %26 = vst.msk [vmem:[#allocation0] sm:$0x1] %vm25, %v24
    %s28 = ssub.s32 2, 1
    %v29 = vld [vmem:[#allocation0] sm:%s28]
    %s31 = ssub.s32 2, 1
    %32 = vst [vmem:[%s1] sm:%s31] %v29

// kernel: deconvolution_forward.2
$region0: #{deconvolution_forward.2}
  #allocation0 [shape = 'u32[]', space=smem, size = 0x4, offset = 0x4, fixed_abs, tag = 'smem constant byte address 0x4 - core index']
  #allocation1 [shape = 'u32[72,128]{1,0:T(1,128)}', space=vmem, size = 0x9000, scoped, tag = 'internal scratch']
  %s0 = inlined_call_operand.vmem [shape: f32[128,32], index: 0, kind: input, shape index: {}]
  %s1 = inlined_call_operand.vmem [shape: f32[32,128], index: 1, kind: input, shape index: {}]
  %s2 = inlined_call_operand.vmem [shape: f32[1,8,128], index: 2, kind: output, shape index: {0}]
  %s3 = inlined_call_operand.vmem [shape: f32[1,8,128], index: 3, kind: output, shape index: {1}]
  %4 = xla_tuple %s2, %s3
  %s5 = sld [smem:[#allocation0]]
  $region26: #{deconvolution_forward.2} parent=0
    _
  %s7 = ssub.s32 1, %s5
  %s8 = scalar_select 0, %s7, %s5
  // Predicated region
  $region2: #{deconvolution_forward.2} parent=0 // pred_check
    _
  $region3: #{deconvolution_forward.2} parent=0 // pred_check_branch
    %10 = sbr.rel (0) target = $region5
  $region4: #{deconvolution_forward.2} parent=0 // pred_region
    _
  $region5: #{deconvolution_forward.2} parent=0 // pred_fallthru
    _
  // Predicated region
  $region6: #{deconvolution_forward.2} parent=0 // pred_check
    _
  $region7: #{deconvolution_forward.2} parent=0 // pred_check_branch
    %12 = sbr.rel (0) target = $region9
  $region8: #{deconvolution_forward.2} parent=0 // pred_region
    _
  $region9: #{deconvolution_forward.2} parent=0 // pred_fallthru
    _
  %v13 = vld [vmem:[%s0] sm:$0xff]
  %v14 = vld [vmem:[%s0 + $0x8] sm:$0xff]
  %v15 = vld [vmem:[%s0 + $0x10] sm:$0xff]
  %v16 = vld [vmem:[%s0 + $0x18] sm:$0xff]
  %v17 = vld [vmem:[%s0 + $0x20] sm:$0xff]
  %v18 = vld [vmem:[%s0 + $0x28] sm:$0xff]
  %v19 = vld [vmem:[%s0 + $0x30] sm:$0xff]
  %v20 = vld [vmem:[%s0 + $0x38] sm:$0xff]
  %v21 = vld [vmem:[%s0 + $0x40] sm:$0xff]
  %v22 = vld [vmem:[%s0 + $0x48] sm:$0xff]
  %v23 = vld [vmem:[%s0 + $0x50] sm:$0xff]
  %v24 = vld [vmem:[%s0 + $0x58] sm:$0xff]
  %v25 = vld [vmem:[%s0 + $0x60] sm:$0xff]
  %v26 = vld [vmem:[%s0 + $0x68] sm:$0xff]
  %v27 = vld [vmem:[%s0 + $0x70] sm:$0xff]
  %v28 = vld [vmem:[%s0 + $0x78] sm:$0xff]
  %v29 = vld [vmem:[%s1] sm:$0xff]
  %v30 = vld [vmem:[%s1 + $0x8] sm:$0xff]
  %v31 = vld [vmem:[%s1 + $0x10] sm:$0xff]
  %v32 = vld [vmem:[%s1 + $0x18] sm:$0xff]
  %vm33 = vcmask 261120
  %v35 = vsel %vm33, %v13, 0
  %v38 = vsel %vm33, %v14, 0
  %v41 = vsel %vm33, %v15, 0
  %v44 = vsel %vm33, %v16, 0
  %v47 = vsel %vm33, %v17, 0
  %v50 = vsel %vm33, %v18, 0
  %v53 = vsel %vm33, %v19, 0
  %v56 = vsel %vm33, %v20, 0
  %v59 = vsel %vm33, %v21, 0
  %v62 = vsel %vm33, %v22, 0
  %v65 = vsel %vm33, %v23, 0
  %v68 = vsel %vm33, %v24, 0
  %v71 = vsel %vm33, %v25, 0
  %v74 = vsel %vm33, %v26, 0
  %v77 = vsel %vm33, %v27, 0
  %v80 = vsel %vm33, %v28, 0
  %82 = vmatpush.msra.mxu0 0.0
  %83 = vmatpush.msra.mxu0 0.0
  %84 = vmatpush.msra.mxu0 0.0
  %85 = vmatpush.msra.mxu0 0.0
  %86 = vmatpush.msra.mxu0 0.0
  %87 = vmatpush.msra.mxu0 0.0
  %88 = vmatpush.msra.mxu0 0.0
  %89 = vmatpush.msra.mxu0 0.0
  %90 = vmatpush.msra.mxu0 0.0
  %91 = vmatpush.msra.mxu0 0.0
  %92 = vmatpush.msra.mxu0 0.0
  %93 = vmatpush.msra.mxu0 0.0
  %94 = vmatpush.msra.mxu0 %v32
  %95 = vmatpush.msra.mxu0 %v31
  %96 = vmatpush.msra.mxu0 %v30
  %97 = vmatpush.msra.mxu0 %v29
  %98 = vmatmul.f32.gmra.mxu0 %v35
  %v99 = vpop.f32.mrf.mxu0
  %v100 = vadd.f32 0.0, %v99
  %101 = vmatmul.f32.gmra.mxu0 %v38
  %v102 = vpop.f32.mrf.mxu0
  %v103 = vadd.f32 0.0, %v102
  %104 = vmatmul.f32.gmra.mxu0 %v41
  %v105 = vpop.f32.mrf.mxu0
  %v106 = vadd.f32 0.0, %v105
  %107 = vmatmul.f32.gmra.mxu0 %v44
  %v108 = vpop.f32.mrf.mxu0
  %v109 = vadd.f32 0.0, %v108
  %110 = vmatmul.f32.gmra.mxu0 %v47
  %v111 = vpop.f32.mrf.mxu0
  %v112 = vadd.f32 0.0, %v111
  %113 = vmatmul.f32.gmra.mxu0 %v50
  %v114 = vpop.f32.mrf.mxu0
  %v115 = vadd.f32 0.0, %v114
  %116 = vmatmul.f32.gmra.mxu0 %v53
  %v117 = vpop.f32.mrf.mxu0
  %v118 = vadd.f32 0.0, %v117
  %119 = vmatmul.f32.gmra.mxu0 %v56
  %v120 = vpop.f32.mrf.mxu0
  %v121 = vadd.f32 0.0, %v120
  %122 = vmatmul.f32.gmra.mxu0 %v59
  %v123 = vpop.f32.mrf.mxu0
  %v124 = vadd.f32 0.0, %v123
  %125 = vmatmul.f32.gmra.mxu0 %v62
  %v126 = vpop.f32.mrf.mxu0
  %v127 = vadd.f32 0.0, %v126
  %128 = vmatmul.f32.gmra.mxu0 %v65
  %v129 = vpop.f32.mrf.mxu0
  %v130 = vadd.f32 0.0, %v129
  %131 = vmatmul.f32.gmra.mxu0 %v68
  %v132 = vpop.f32.mrf.mxu0
  %v133 = vadd.f32 0.0, %v132
  %134 = vmatmul.f32.gmra.mxu0 %v71
  %v135 = vpop.f32.mrf.mxu0
  %v136 = vadd.f32 0.0, %v135
  %137 = vmatmul.f32.gmra.mxu0 %v74
  %v138 = vpop.f32.mrf.mxu0
  %v139 = vadd.f32 0.0, %v138
  %140 = vmatmul.f32.gmra.mxu0 %v77
  %v141 = vpop.f32.mrf.mxu0
  %v142 = vadd.f32 0.0, %v141
  %143 = vmatmul.f32.gmra.mxu0 %v80
  %v144 = vpop.f32.mrf.mxu0
  %v145 = vadd.f32 0.0, %v144
  %146 = vdwg.mxu0
  %v147 = vadd.f32 %v100, %v103
  %v148 = vadd.f32 %v147, %v106
  %v149 = vadd.f32 %v148, %v109
  %v150 = vadd.f32 %v149, %v112
  %v151 = vadd.f32 %v150, %v115
  %v152 = vadd.f32 %v151, %v118
  %v153 = vadd.f32 %v152, %v121
  %v154 = vadd.f32 %v153, %v124
  %v155 = vadd.f32 %v154, %v127
  %v156 = vadd.f32 %v155, %v130
  %v157 = vadd.f32 %v156, %v133
  %v158 = vadd.f32 %v157, %v136
  %v159 = vadd.f32 %v158, %v139
  %v160 = vadd.f32 %v159, %v142
  %v161 = vadd.f32 %v160, %v145
  %162 = vst [vmem:[%s2] sm:$0xff] %v161
  %v163 = vmul.f32 %v100, %v100
  %v164 = vmul.f32 %v103, %v103
  %v165 = vmul.f32 %v106, %v106
  %v166 = vmul.f32 %v109, %v109
  %v167 = vmul.f32 %v112, %v112
  %v168 = vmul.f32 %v115, %v115
  %v169 = vmul.f32 %v118, %v118
  %v170 = vmul.f32 %v121, %v121
  %v171 = vmul.f32 %v124, %v124
  %v172 = vmul.f32 %v127, %v127
  %v173 = vmul.f32 %v130, %v130
  %v174 = vmul.f32 %v133, %v133
  %v175 = vmul.f32 %v136, %v136
  %v176 = vmul.f32 %v139, %v139
  %v177 = vmul.f32 %v142, %v142
  %v178 = vmul.f32 %v145, %v145
  %v179 = vadd.f32 %v163, %v164
  %v180 = vadd.f32 %v179, %v165
  %v181 = vadd.f32 %v180, %v166
  %v182 = vadd.f32 %v181, %v167
  %v183 = vadd.f32 %v182, %v168
  %v184 = vadd.f32 %v183, %v169
  %v185 = vadd.f32 %v184, %v170
  %v186 = vadd.f32 %v185, %v171
  %v187 = vadd.f32 %v186, %v172
  %v188 = vadd.f32 %v187, %v173
  %v189 = vadd.f32 %v188, %v174
  %v190 = vadd.f32 %v189, %v175
  %v191 = vadd.f32 %v190, %v176
  %v192 = vadd.f32 %v191, %v177
  %v193 = vadd.f32 %v192, %v178
  %194 = vst [vmem:[%s3] sm:$0xff] %v193
  // Predicated region
  $region10: #{deconvolution_forward.2} parent=0 // pred_check
    _
  $region11: #{deconvolution_forward.2} parent=0 // pred_check_branch
    %196 = sbr.rel (0) target = $region13
  $region12: #{deconvolution_forward.2} parent=0 // pred_region
    _
  $region13: #{deconvolution_forward.2} parent=0 // pred_fallthru
    _
  // Predicated region
  $region14: #{deconvolution_forward.2} parent=0 // pred_check
    _
  $region15: #{deconvolution_forward.2} parent=0 // pred_check_branch
    %198 = sbr.rel (0) target = $region17
  $region16: #{deconvolution_forward.2} parent=0 // pred_region
    _
  $region17: #{deconvolution_forward.2} parent=0 // pred_fallthru
    _
  // Predicated region
  $region18: #{deconvolution_forward.2} parent=0 // pred_check
    _
  $region19: #{deconvolution_forward.2} parent=0 // pred_check_branch
    %200 = sbr.rel (0) target = $region21
  $region20: #{deconvolution_forward.2} parent=0 // pred_region
    _
  $region21: #{deconvolution_forward.2} parent=0 // pred_fallthru
    _
  // Predicated region
  $region22: #{deconvolution_forward.2} parent=0 // pred_check
    _
  $region23: #{deconvolution_forward.2} parent=0 // pred_check_branch
    %202 = sbr.rel (0) target = $region25
  $region24: #{deconvolution_forward.2} parent=0 // pred_region
    _
  $region25: #{deconvolution_forward.2} parent=0 // pred_fallthru
    _

// kernel: deconvolution_forward.3
$region0: #{deconvolution_forward.3}
  #allocation0 [shape = 'u32[]', space=smem, size = 0x4, offset = 0x4, fixed_abs, tag = 'smem constant byte address 0x4 - core index']
  #allocation1 [shape = 'u32[72,128]{1,0:T(1,128)}', space=vmem, size = 0x9000, scoped, tag = 'internal scratch']
  %s0 = inlined_call_operand.vmem [shape: f32[128,32], index: 0, kind: input, shape index: {}]
  %s1 = inlined_call_operand.vmem [shape: f32[32,128], index: 1, kind: input, shape index: {}]
  %s2 = inlined_call_operand.vmem [shape: f32[1,128], index: 2, kind: input, shape index: {}]
  %s3 = inlined_call_operand.vmem [shape: f32[1,128], index: 3, kind: input, shape index: {}]
  %s4 = inlined_call_operand.vmem [shape: f32[128,128], index: 4, kind: output, shape index: {}]
  %s5 = sld [smem:[#allocation0]]
  $region26: #{deconvolution_forward.3} parent=0
    _
  %s7 = ssub.s32 1, %s5
  %s8 = scalar_select 0, %s7, %s5
  // Predicated region
  $region2: #{deconvolution_forward.3} parent=0 // pred_check
    _
  $region3: #{deconvolution_forward.3} parent=0 // pred_check_branch
    %10 = sbr.rel (0) target = $region5
  $region4: #{deconvolution_forward.3} parent=0 // pred_region
    _
  $region5: #{deconvolution_forward.3} parent=0 // pred_fallthru
    _
  // Predicated region
  $region6: #{deconvolution_forward.3} parent=0 // pred_check
    _
  $region7: #{deconvolution_forward.3} parent=0 // pred_check_branch
    %12 = sbr.rel (0) target = $region9
  $region8: #{deconvolution_forward.3} parent=0 // pred_region
    _
  $region9: #{deconvolution_forward.3} parent=0 // pred_fallthru
    _
  // Predicated region
  $region10: #{deconvolution_forward.3} parent=0 // pred_check
    _
  $region11: #{deconvolution_forward.3} parent=0 // pred_check_branch
    %14 = sbr.rel (0) target = $region13
  $region12: #{deconvolution_forward.3} parent=0 // pred_region
    _
  $region13: #{deconvolution_forward.3} parent=0 // pred_fallthru
    _
  // Predicated region
  $region14: #{deconvolution_forward.3} parent=0 // pred_check
    _
  $region15: #{deconvolution_forward.3} parent=0 // pred_check_branch
    %16 = sbr.rel (0) target = $region17
  $region16: #{deconvolution_forward.3} parent=0 // pred_region
    _
  $region17: #{deconvolution_forward.3} parent=0 // pred_fallthru
    _
  %v17 = vld [vmem:[%s0] sm:$0xff]
  %v18 = vld [vmem:[%s0 + $0x8] sm:$0xff]
  %v19 = vld [vmem:[%s0 + $0x10] sm:$0xff]
  %v20 = vld [vmem:[%s0 + $0x18] sm:$0xff]
  %v21 = vld [vmem:[%s0 + $0x20] sm:$0xff]
  %v22 = vld [vmem:[%s0 + $0x28] sm:$0xff]
  %v23 = vld [vmem:[%s0 + $0x30] sm:$0xff]
  %v24 = vld [vmem:[%s0 + $0x38] sm:$0xff]
  %v25 = vld [vmem:[%s0 + $0x40] sm:$0xff]
  %v26 = vld [vmem:[%s0 + $0x48] sm:$0xff]
  %v27 = vld [vmem:[%s0 + $0x50] sm:$0xff]
  %v28 = vld [vmem:[%s0 + $0x58] sm:$0xff]
  %v29 = vld [vmem:[%s0 + $0x60] sm:$0xff]
  %v30 = vld [vmem:[%s0 + $0x68] sm:$0xff]
  %v31 = vld [vmem:[%s0 + $0x70] sm:$0xff]
  %v32 = vld [vmem:[%s0 + $0x78] sm:$0xff]
  %v33 = vld [vmem:[%s1] sm:$0xff]
  %v34 = vld [vmem:[%s1 + $0x8] sm:$0xff]
  %v35 = vld [vmem:[%s1 + $0x10] sm:$0xff]
  %v36 = vld [vmem:[%s1 + $0x18] sm:$0xff]
  %vm37 = vcmask 261120
  %v39 = vsel %vm37, %v17, 0
  %v42 = vsel %vm37, %v18, 0
  %v45 = vsel %vm37, %v19, 0
  %v48 = vsel %vm37, %v20, 0
  %v51 = vsel %vm37, %v21, 0
  %v54 = vsel %vm37, %v22, 0
  %v57 = vsel %vm37, %v23, 0
  %v60 = vsel %vm37, %v24, 0
  %v63 = vsel %vm37, %v25, 0
  %v66 = vsel %vm37, %v26, 0
  %v69 = vsel %vm37, %v27, 0
  %v72 = vsel %vm37, %v28, 0
  %v75 = vsel %vm37, %v29, 0
  %v78 = vsel %vm37, %v30, 0
  %v81 = vsel %vm37, %v31, 0
  %v84 = vsel %vm37, %v32, 0
  %86 = vmatpush.msra.mxu0 0.0
  %87 = vmatpush.msra.mxu0 0.0
  %88 = vmatpush.msra.mxu0 0.0
  %89 = vmatpush.msra.mxu0 0.0
  %90 = vmatpush.msra.mxu0 0.0
  %91 = vmatpush.msra.mxu0 0.0
  %92 = vmatpush.msra.mxu0 0.0
  %93 = vmatpush.msra.mxu0 0.0
  %94 = vmatpush.msra.mxu0 0.0
  %95 = vmatpush.msra.mxu0 0.0
  %96 = vmatpush.msra.mxu0 0.0
  %97 = vmatpush.msra.mxu0 0.0
  %98 = vmatpush.msra.mxu0 %v36
  %99 = vmatpush.msra.mxu0 %v35
  %100 = vmatpush.msra.mxu0 %v34
  %101 = vmatpush.msra.mxu0 %v33
  %102 = vmatmul.f32.gmra.mxu0 %v39
  %v103 = vpop.f32.mrf.mxu0
  %v104 = vadd.f32 0.0, %v103
  %105 = vmatmul.f32.gmra.mxu0 %v42
  %v106 = vpop.f32.mrf.mxu0
  %v107 = vadd.f32 0.0, %v106
  %108 = vmatmul.f32.gmra.mxu0 %v45
  %v109 = vpop.f32.mrf.mxu0
  %v110 = vadd.f32 0.0, %v109
  %111 = vmatmul.f32.gmra.mxu0 %v48
  %v112 = vpop.f32.mrf.mxu0
  %v113 = vadd.f32 0.0, %v112
  %114 = vmatmul.f32.gmra.mxu0 %v51
  %v115 = vpop.f32.mrf.mxu0
  %v116 = vadd.f32 0.0, %v115
  %117 = vmatmul.f32.gmra.mxu0 %v54
  %v118 = vpop.f32.mrf.mxu0
  %v119 = vadd.f32 0.0, %v118
  %120 = vmatmul.f32.gmra.mxu0 %v57
  %v121 = vpop.f32.mrf.mxu0
  %v122 = vadd.f32 0.0, %v121
  %123 = vmatmul.f32.gmra.mxu0 %v60
  %v124 = vpop.f32.mrf.mxu0
  %v125 = vadd.f32 0.0, %v124
  %126 = vmatmul.f32.gmra.mxu0 %v63
  %v127 = vpop.f32.mrf.mxu0
  %v128 = vadd.f32 0.0, %v127
  %129 = vmatmul.f32.gmra.mxu0 %v66
  %v130 = vpop.f32.mrf.mxu0
  %v131 = vadd.f32 0.0, %v130
  %132 = vmatmul.f32.gmra.mxu0 %v69
  %v133 = vpop.f32.mrf.mxu0
  %v134 = vadd.f32 0.0, %v133
  %135 = vmatmul.f32.gmra.mxu0 %v72
  %v136 = vpop.f32.mrf.mxu0
  %v137 = vadd.f32 0.0, %v136
  %138 = vmatmul.f32.gmra.mxu0 %v75
  %v139 = vpop.f32.mrf.mxu0
  %v140 = vadd.f32 0.0, %v139
  %141 = vmatmul.f32.gmra.mxu0 %v78
  %v142 = vpop.f32.mrf.mxu0
  %v143 = vadd.f32 0.0, %v142
  %144 = vmatmul.f32.gmra.mxu0 %v81
  %v145 = vpop.f32.mrf.mxu0
  %v146 = vadd.f32 0.0, %v145
  %147 = vmatmul.f32.gmra.mxu0 %v84
  %v148 = vpop.f32.mrf.mxu0
  %v149 = vadd.f32 0.0, %v148
  %150 = vdwg.mxu0
  %v151 = vld [vmem:[%s2] sm:$0x1]
  %v153 = vperm.slane %v151, 0
  %v155 = vmul.f32 %v104, %v153
  %v156 = vmul.f32 %v107, %v153
  %v157 = vmul.f32 %v110, %v153
  %v158 = vmul.f32 %v113, %v153
  %v159 = vmul.f32 %v116, %v153
  %v160 = vmul.f32 %v119, %v153
  %v161 = vmul.f32 %v122, %v153
  %v162 = vmul.f32 %v125, %v153
  %v163 = vmul.f32 %v128, %v153
  %v164 = vmul.f32 %v131, %v153
  %v165 = vmul.f32 %v134, %v153
  %v166 = vmul.f32 %v137, %v153
  %v167 = vmul.f32 %v140, %v153
  %v168 = vmul.f32 %v143, %v153
  %v169 = vmul.f32 %v146, %v153
  %v170 = vmul.f32 %v149, %v153
  %v171 = vld [vmem:[%s3] sm:$0x1]
  %v173 = vperm.slane %v171, 0
  %v175 = vadd.f32 %v155, %v173
  %v176 = vadd.f32 %v156, %v173
  %v177 = vadd.f32 %v157, %v173
  %v178 = vadd.f32 %v158, %v173
  %v179 = vadd.f32 %v159, %v173
  %v180 = vadd.f32 %v160, %v173
  %v181 = vadd.f32 %v161, %v173
  %v182 = vadd.f32 %v162, %v173
  %v183 = vadd.f32 %v163, %v173
  %v184 = vadd.f32 %v164, %v173
  %v185 = vadd.f32 %v165, %v173
  %v186 = vadd.f32 %v166, %v173
  %v187 = vadd.f32 %v167, %v173
  %v188 = vadd.f32 %v168, %v173
  %v189 = vadd.f32 %v169, %v173
  %v190 = vadd.f32 %v170, %v173
  %v191 = vmax.f32 %v175, 0.0
  %v192 = vmax.f32 %v176, 0.0
  %v193 = vmax.f32 %v177, 0.0
  %v194 = vmax.f32 %v178, 0.0
  %v195 = vmax.f32 %v179, 0.0
  %v196 = vmax.f32 %v180, 0.0
  %v197 = vmax.f32 %v181, 0.0
  %v198 = vmax.f32 %v182, 0.0
  %v199 = vmax.f32 %v183, 0.0
  %v200 = vmax.f32 %v184, 0.0
  %v201 = vmax.f32 %v185, 0.0
  %v202 = vmax.f32 %v186, 0.0
  %v203 = vmax.f32 %v187, 0.0
  %v204 = vmax.f32 %v188, 0.0
  %v205 = vmax.f32 %v189, 0.0
  %v206 = vmax.f32 %v190, 0.0
  %207 = vst [vmem:[%s4] sm:$0xff] %v191
  %208 = vst [vmem:[%s4 + $0x8] sm:$0xff] %v192
  %209 = vst [vmem:[%s4 + $0x10] sm:$0xff] %v193
  %210 = vst [vmem:[%s4 + $0x18] sm:$0xff] %v194
  %211 = vst [vmem:[%s4 + $0x20] sm:$0xff] %v195
  %212 = vst [vmem:[%s4 + $0x28] sm:$0xff] %v196
  %213 = vst [vmem:[%s4 + $0x30] sm:$0xff] %v197
  %214 = vst [vmem:[%s4 + $0x38] sm:$0xff] %v198
  %215 = vst [vmem:[%s4 + $0x40] sm:$0xff] %v199
  %216 = vst [vmem:[%s4 + $0x48] sm:$0xff] %v200
  %217 = vst [vmem:[%s4 + $0x50] sm:$0xff] %v201
  %218 = vst [vmem:[%s4 + $0x58] sm:$0xff] %v202
  %219 = vst [vmem:[%s4 + $0x60] sm:$0xff] %v203
  %220 = vst [vmem:[%s4 + $0x68] sm:$0xff] %v204
  %221 = vst [vmem:[%s4 + $0x70] sm:$0xff] %v205
  %222 = vst [vmem:[%s4 + $0x78] sm:$0xff] %v206
  // Predicated region
  $region18: #{deconvolution_forward.3} parent=0 // pred_check
    _
  $region19: #{deconvolution_forward.3} parent=0 // pred_check_branch
    %224 = sbr.rel (0) target = $region21
  $region20: #{deconvolution_forward.3} parent=0 // pred_region
    _
  $region21: #{deconvolution_forward.3} parent=0 // pred_fallthru
    _
  // Predicated region
  $region22: #{deconvolution_forward.3} parent=0 // pred_check
    _
  $region23: #{deconvolution_forward.3} parent=0 // pred_check_branch
    %226 = sbr.rel (0) target = $region25
  $region24: #{deconvolution_forward.3} parent=0 // pred_region
    _
  $region25: #{deconvolution_forward.3} parent=0 // pred_fallthru
    _

</llo_original>
